<compile_context>
chip_gen: v6e
topology: v6e:2x2x1
jax: 0.10.0
libtpu: 0.0.40
codegen_flags: <defaults>
</compile_context>

<pallas_src>
import functools

import jax
import jax.numpy as jnp
from jax.experimental import pallas as pl
from jax.experimental.pallas import tpu as pltpu

_LANES = 128
_DEGREE = 3
_TAB_COLS = 5  # per span: [b0, b1, b2, b3, upper_breakpoint] (power basis in u)


def _round_up(a, b):
    return ((a + b - 1) // b) * b


def _affine_mul(c0, c1, p):
    """(c0 + c1*u) * p(u) for a degree<=3 poly p (exact truncation to deg 3)."""
    return jnp.stack([
        c0 * p[0],
        c0 * p[1] + c1 * p[0],
        c0 * p[2] + c1 * p[1],
        c0 * p[3] + c1 * p[2],
    ])


def _build_span_table(knots, csum, degree=_DEGREE):
    """Per-span cubic coefficients of the summed B-spline (host side).

    For each knot span m in [degree, n-1] (n = len(knots)-degree-1, the range
    scipy clips to for evaluation/extrapolation) the spline restricted to that
    span is a cubic.  De Boor's recursion is expanded symbolically (exact
    polynomial algebra) in the local coordinate, then re-expanded about a
    single global center u = x - center, and flattened into a tiny
    SMEM-friendly f32 table of shape (S*5 + 1,) -- the trailing scalar is the
    expansion center.
    """
    K = knots.shape[0]
    k = degree
    n = K - k - 1                     # number of basis functions (scipy)
    S = n - k                         # number of polynomial spans
    assert S >= 1, "num_knots must be at least 2*degree + 2"
    knots = knots.astype(jnp.float32)
    csum = csum.astype(jnp.float32)
    zero = jnp.zeros((), jnp.float32)
    # Single expansion center (precision guard for the global power basis).
    center = 0.5 * (knots[k] + knots[n])

    rows = []
    for s in range(S):
        m = k + s
        t0 = knots[m]
        h = knots[m + 1] - knots[m]   # assumes strictly increasing knots
        # d[j]: degree<=3 polynomials in v = (x - t0)/h, power-basis vectors.
        d = [jnp.stack([csum[m - k + j], zero, zero, zero]) for j in range(k + 1)]
        for r in range(1, k + 1):
            for j in range(k, r - 1, -1):
                tl = knots[m + j - k]
                tr_ = knots[m + j + 1 - r]
                denom = tr_ - tl
                alpha0 = (t0 - tl) / denom      # alpha(v) = alpha0 + alpha1*v
                alpha1 = h / denom
                d[j] = (_affine_mul(1.0 - alpha0, -alpha1, d[j - 1])
                        + _affine_mul(alpha0, alpha1, d[j]))
        a = d[k]                                # coeffs of v^0..v^3
        # Re-expand in u = x - center via Horner composition with v = e0+e1*u.
        e1 = 1.0 / h
        e0 = (center - t0) * e1
        b = jnp.stack([a[3], zero, zero, zero])
        for j in (2, 1, 0):
            b = _affine_mul(e0, e1, b)
            b = b.at[0].add(a[j])
        bp = knots[m + 1] if s < S - 1 else knots[K - 1]   # last one unused
        rows.append(jnp.stack([b[0], b[1], b[2], b[3], bp]))
    rows.append(center[None])                   # trailing expansion center
    return jnp.concatenate(rows), S             # (S*5 + 1,), S


def _spline_kernel(tab_ref, x_ref, o_ref, *, num_spans):
    """Select the span's 4 cubic coefficients via a where-chain, then Horner."""
    x = x_ref[...].astype(jnp.float32)          # (TR, 128) lane-dense tile

    def e(s, c):                                # scalar from the SMEM table
        return tab_ref[s * _TAB_COLS + c]

    b0, b1, b2, b3 = e(0, 0), e(0, 1), e(0, 2), e(0, 3)
    for s in range(1, num_spans):               # 1 cmp + 4 selects per span
        ge = x >= e(s - 1, 4)
        b0 = jnp.where(ge, e(s, 0), b0)
        b1 = jnp.where(ge, e(s, 1), b1)
        b2 = jnp.where(ge, e(s, 2), b2)
        b3 = jnp.where(ge, e(s, 3), b3)
    u = x - tab_ref[num_spans * _TAB_COLS]      # centered coordinate
    y = ((b3 * u + b2) * u + b1) * u + b0       # 3 Horner steps
    o_ref[...] = y.astype(o_ref.dtype)


def spline_activation(x, knots, coeffs, *, tile_rows=2048, degree=_DEGREE,
                      expand_knots=True):
    """Pallas forward of SplineActivation: x (B, F) -> (B, F, num_knots)."""
    B, F = x.shape
    K = knots.shape[0]
    # Linearity: summing over the num_params axis commutes with the spline.
    csum = jnp.sum(coeffs.astype(jnp.float32), axis=-1)
    table, num_spans = _build_span_table(knots, csum, degree)

    # Lane-dense layout: flatten to (rows, 128); pad only if lanes don't align.
    P = B * F
    rows = pl.cdiv(P, _LANES)
    x_flat = jnp.ravel(x)                       # native dtype, no extra pass
    lane_pad = rows * _LANES - P
    if lane_pad:
        x_flat = jnp.pad(x_flat, (0, lane_pad))
    x2d = x_flat.reshape(rows, _LANES)

    # Dtype-aware sublane multiple (f32:8, bf16:16, 1-byte:32).
    sub = {4: 8, 2: 16, 1: 32}.get(jnp.dtype(x.dtype).itemsize, 8)
    if rows <= 2 * sub:
        tr = rows                               # single full-extent block
    else:
        # Cap at ~rows/2 so the parallel axis has >=2 steps (v7x megacore).
        cap = _round_up(pl.cdiv(rows, 2), sub)
        tr = max(sub, min(_round_up(min(tile_rows, rows), sub), cap))
    grid = pl.cdiv(rows, tr)                    # last block may be partial

    kernel = functools.partial(_spline_kernel, num_spans=num_spans)
    s2d = pl.pallas_call(
        kernel,
        out_shape=jax.ShapeDtypeStruct((rows, _LANES), x.dtype),
        grid=(grid,),
        in_specs=[
            # Tiny (S*5+1,) f32 constant table: scalars live in SMEM.
            pl.BlockSpec(memory_space=pltpu.MemorySpace.SMEM),
            pl.BlockSpec((tr, _LANES), lambda i: (i, 0)),
        ],
        out_specs=pl.BlockSpec((tr, _LANES), lambda i: (i, 0)),
        compiler_params=pltpu.CompilerParams(
            dimension_semantics=("parallel",),  # shard rows across TCs
        ),
    )(table, x2d)

    if lane_pad:
        s = s2d.reshape(-1)[:P].reshape(B, F)
    else:
        s = s2d.reshape(B, F)
    if not expand_knots:
        return s                                # callers reducing over K
    # Forward result is the spline value replicated along K: one XLA broadcast
    # instead of writing K x the bytes from the kernel.
    return jnp.broadcast_to(s[..., None], (B, F, K))


def _spline_ref(x, knots, coeffs, degree=_DEGREE):
    """Pure-JAX de Boor reference (scipy BSpline semantics, extrapolate=True)."""
    K = knots.shape[0]
    k = degree
    n = K - k - 1
    knots = knots.astype(jnp.float32)
    csum = jnp.sum(coeffs.astype(jnp.float32), axis=-1)
    xf = jnp.ravel(x).astype(jnp.float32)
    cnt = jnp.sum(xf[:, None] >= knots[None, :], axis=1)
    m = jnp.clip(cnt - 1, k, n - 1)
    d = [csum[m - k + j] for j in range(k + 1)]
    for r in range(1, k + 1):
        for j in range(k, r - 1, -1):
            tl = knots[m + j - k]
            tr = knots[m + j + 1 - r]
            alpha = (xf - tl) / (tr - tl)
            d[j] = (1.0 - alpha) * d[j - 1] + alpha * d[j]
    s = d[k].reshape(x.shape)
    return jnp.broadcast_to(s[..., None], x.shape + (K,)).astype(x.dtype)


if __name__ == "__main__":
    NUM_KNOTS, NUM_PARAMS = 10, 1
    key = jax.random.PRNGKey(0)
    kx1, kx2, kx3, kc = jax.random.split(key, 4)

    # Parameters exactly as in SplineActivation.__init__ (deterministic).
    knots = jnp.linspace(0.0, 1.0, NUM_KNOTS, dtype=jnp.float32)
    coeffs = jnp.ones((NUM_KNOTS, NUM_PARAMS), dtype=jnp.float32)

    # 1) Small activation batch; inputs cover all spans plus both
    #    extrapolation sides of scipy's base interval [knots[3], knots[6]].
    B, F = 16, 32
    x = jax.random.uniform(kx1, (B, F), jnp.float32, minval=-0.25, maxval=1.25)
    out = jax.block_until_ready(spline_activation(x, knots, coeffs))
    assert out.shape == (B, F, NUM_KNOTS)
    ref = _spline_ref(x, knots, coeffs)
    assert jnp.allclose(out, ref, rtol=1e-3, atol=1e-3), float(
        jnp.max(jnp.abs(out - ref)))

    # 2) Non-trivial coefficients (num_params=2), multi-step grid with a
    #    partial trailing block (rows=600, tr=128 -> 5 steps, last = 88 rows).
    coeffs2 = jax.random.normal(kc, (NUM_KNOTS, 2), dtype=jnp.float32)
    x2 = jax.random.uniform(kx2, (256, 300), jnp.float32, minval=-0.1, maxval=1.1)
    out2 = jax.block_until_ready(
        spline_activation(x2, knots, coeffs2, tile_rows=128))
    assert out2.shape == (256, 300, NUM_KNOTS)
    ref2 = _spline_ref(x2, knots, coeffs2)
    assert jnp.allclose(out2, ref2, rtol=1e-3, atol=1e-3), float(
        jnp.max(jnp.abs(out2 - ref2)))

    # 3) Native bf16 I/O path + lane-padding path (24*50 not a multiple of 128).
    x3 = jax.random.uniform(kx3, (24, 50), jnp.float32,
                            minval=-0.2, maxval=1.2).astype(jnp.bfloat16)
    out3 = jax.block_until_ready(spline_activation(x3, knots, coeffs2))
    assert out3.shape == (24, 50, NUM_KNOTS)
    assert out3.dtype == jnp.bfloat16
    ref3 = _spline_ref(x3, knots, coeffs2)
    assert jnp.allclose(out3.astype(jnp.float32), ref3.astype(jnp.float32),
                        rtol=2e-2, atol=2e-2), float(
        jnp.max(jnp.abs(out3.astype(jnp.float32) - ref3.astype(jnp.float32))))

    print("KERNEL_OK")
</pallas_src>

<mosaic_0001>
module attributes {stable_mosaic.version = 11 : i64} {
  func.func @_spline_kernel(%arg0: i32, %arg1: memref<16xf32, #tpu.memory_space<smem>>, %arg2: memref<4x128xf32, #tpu.memory_space<vmem>>, %arg3: memref<4x128xf32, #tpu.memory_space<vmem>>) attributes {dimension_semantics = [#tpu.dimension_semantics<parallel>], iteration_bounds = array<i64: 1>, scalar_prefetch = 0 : i64, scratch_operands = 0 : i64, tpu.core_type = #tpu.core_type<tc>, window_params = [{transform_indices = @transform_0, window_bounds = array<i64: 16>}, {transform_indices = @transform_1, window_bounds = array<i64: 4, 128>}, {transform_indices = @transform_2, window_bounds = array<i64: 4, 128>}]} {
    %c0 = arith.constant 0 : index
    %c0_0 = arith.constant 0 : index
    %0 = vector.load %arg2[%c0, %c0_0] : memref<4x128xf32, #tpu.memory_space<vmem>>, vector<4x128xf32>
    %c0_1 = arith.constant 0 : index
    %1 = memref.load %arg1[%c0_1] : memref<16xf32, #tpu.memory_space<smem>>
    %c1 = arith.constant 1 : index
    %2 = memref.load %arg1[%c1] : memref<16xf32, #tpu.memory_space<smem>>
    %c2 = arith.constant 2 : index
    %3 = memref.load %arg1[%c2] : memref<16xf32, #tpu.memory_space<smem>>
    %c3 = arith.constant 3 : index
    %4 = memref.load %arg1[%c3] : memref<16xf32, #tpu.memory_space<smem>>
    %c4 = arith.constant 4 : index
    %5 = memref.load %arg1[%c4] : memref<16xf32, #tpu.memory_space<smem>>
    %6 = vector.broadcast %5 : f32 to vector<4x128xf32>
    %7 = arith.cmpf oge, %0, %6 : vector<4x128xf32>
    %c5 = arith.constant 5 : index
    %8 = memref.load %arg1[%c5] : memref<16xf32, #tpu.memory_space<smem>>
    %9 = vector.broadcast %8 : f32 to vector<4x128xf32>
    %10 = vector.broadcast %1 : f32 to vector<4x128xf32>
    %11 = arith.select %7, %9, %10 : vector<4x128xi1>, vector<4x128xf32>
    %c6 = arith.constant 6 : index
    %12 = memref.load %arg1[%c6] : memref<16xf32, #tpu.memory_space<smem>>
    %13 = vector.broadcast %12 : f32 to vector<4x128xf32>
    %14 = vector.broadcast %2 : f32 to vector<4x128xf32>
    %15 = arith.select %7, %13, %14 : vector<4x128xi1>, vector<4x128xf32>
    %c7 = arith.constant 7 : index
    %16 = memref.load %arg1[%c7] : memref<16xf32, #tpu.memory_space<smem>>
    %17 = vector.broadcast %16 : f32 to vector<4x128xf32>
    %18 = vector.broadcast %3 : f32 to vector<4x128xf32>
    %19 = arith.select %7, %17, %18 : vector<4x128xi1>, vector<4x128xf32>
    %c8 = arith.constant 8 : index
    %20 = memref.load %arg1[%c8] : memref<16xf32, #tpu.memory_space<smem>>
    %21 = vector.broadcast %20 : f32 to vector<4x128xf32>
    %22 = vector.broadcast %4 : f32 to vector<4x128xf32>
    %23 = arith.select %7, %21, %22 : vector<4x128xi1>, vector<4x128xf32>
    %c9 = arith.constant 9 : index
    %24 = memref.load %arg1[%c9] : memref<16xf32, #tpu.memory_space<smem>>
    %25 = vector.broadcast %24 : f32 to vector<4x128xf32>
    %26 = arith.cmpf oge, %0, %25 : vector<4x128xf32>
    %c10 = arith.constant 10 : index
    %27 = memref.load %arg1[%c10] : memref<16xf32, #tpu.memory_space<smem>>
    %28 = vector.broadcast %27 : f32 to vector<4x128xf32>
    %29 = arith.select %26, %28, %11 : vector<4x128xi1>, vector<4x128xf32>
    %c11 = arith.constant 11 : index
    %30 = memref.load %arg1[%c11] : memref<16xf32, #tpu.memory_space<smem>>
    %31 = vector.broadcast %30 : f32 to vector<4x128xf32>
    %32 = arith.select %26, %31, %15 : vector<4x128xi1>, vector<4x128xf32>
    %c12 = arith.constant 12 : index
    %33 = memref.load %arg1[%c12] : memref<16xf32, #tpu.memory_space<smem>>
    %34 = vector.broadcast %33 : f32 to vector<4x128xf32>
    %35 = arith.select %26, %34, %19 : vector<4x128xi1>, vector<4x128xf32>
    %c13 = arith.constant 13 : index
    %36 = memref.load %arg1[%c13] : memref<16xf32, #tpu.memory_space<smem>>
    %37 = vector.broadcast %36 : f32 to vector<4x128xf32>
    %38 = arith.select %26, %37, %23 : vector<4x128xi1>, vector<4x128xf32>
    %c15 = arith.constant 15 : index
    %39 = memref.load %arg1[%c15] : memref<16xf32, #tpu.memory_space<smem>>
    %40 = vector.broadcast %39 : f32 to vector<4x128xf32>
    %41 = arith.subf %0, %40 : vector<4x128xf32>
    %42 = arith.mulf %38, %41 : vector<4x128xf32>
    %43 = arith.addf %42, %35 : vector<4x128xf32>
    %44 = arith.mulf %43, %41 : vector<4x128xf32>
    %45 = arith.addf %44, %32 : vector<4x128xf32>
    %46 = arith.mulf %45, %41 : vector<4x128xf32>
    %47 = arith.addf %46, %29 : vector<4x128xf32>
    %c0_2 = arith.constant 0 : index
    %c0_3 = arith.constant 0 : index
    %48 = vector.load %arg3[%c0_2, %c0_3] : memref<4x128xf32, #tpu.memory_space<vmem>>, vector<4x128xf32>
    tpu.vector_store %arg3[%c0_2, %c0_3], %47 {strides = array<i32>} : memref<4x128xf32, #tpu.memory_space<vmem>>, vector<4x128xf32>,
    return
  }
  func.func @transform_0(%arg0: i32) -> i32 {
    %c0_i32 = arith.constant 0 : i32
    %c0_i32_0 = arith.constant 0 : i32
    return %c0_i32 : i32
  }
  func.func @transform_1(%arg0: i32) -> (i32, i32) {
    %c0_i32 = arith.constant 0 : i32
    %c0_i32_0 = arith.constant 0 : i32
    return %arg0, %c0_i32 : i32, i32
  }
  func.func @transform_2(%arg0: i32) -> (i32, i32) {
    %c0_i32 = arith.constant 0 : i32
    %c0_i32_0 = arith.constant 0 : i32
    return %arg0, %c0_i32 : i32, i32
  }
}

</mosaic_0001>

<llo_original>
// kernel: tpu_custom_call.1
$region0: #{tpu_custom_call.1}
  #allocation0 [shape = 'u32[]', space=smem, size = 0x4, offset = 0x4, fixed_abs, tag = 'smem constant byte address 0x4 - core index']
  #allocation1 [shape = 'u32[144,128]{1,0:T(1,128)}', space=vmem, size = 0x12000, scoped, tag = 'internal scratch']
  %s0 = inlined_call_operand.hbm [shape: f32[16], index: 0, kind: input, shape index: {}]
  %s1 = inlined_call_operand.hbm [shape: f32[4,128], index: 1, kind: input, shape index: {}]
  %s2 = inlined_call_operand.hbm [shape: f32[4,128], index: 2, kind: output, shape index: {}]
  %s3 = sld [smem:[#allocation0]]
  $region26: #{tpu_custom_call.1} parent=0
    _
  %s5 = ssub.s32 1, %s3
  %s6 = scalar_select 0, %s5, %s3
  $region1: #{tpu_custom_call.1} parent=0
    #allocation2 [shape = 'u8[512]{0}', space=smem, size = 0x200, scoped, tag = 'input window, operand 0, single buffered']
    #allocation3 [shape = 's32[1]{0}', space=sflag, size = 0x4, scoped, tag = 'scoped memory for tpu_custom_call.1']
    #allocation4 [shape = 's32[1]{0}', space=sflag, size = 0x4, scoped, tag = 'scoped memory for tpu_custom_call.1']
    #allocation5 [shape = 's32[1]{0}', space=sflag, size = 0x4, scoped, tag = 'scoped memory for tpu_custom_call.1']
    #allocation6 [shape = 'u8[2048]{0}', space=vmem, size = 0x800, scoped, tag = 'input window, operand 1, single buffered']
    #allocation7 [shape = 'u8[2048]{0}', space=vmem, size = 0x800, scoped, tag = 'output window, operand 0, single buffered']
    %7 = vsyncpa [#allocation5], 0
    %8 = vsyncpa [#allocation3], 0
    %9 = vsyncpa [#allocation4], 0
    // Predicated region
    $region2: #{tpu_custom_call.1} parent=1 // pred_check
      _
    $region3: #{tpu_custom_call.1} parent=1 // pred_check_branch
      %11 = sbr.rel (0) target = $region5
    $region4: #{tpu_custom_call.1} parent=1 // pred_region
      %s13 = ssub.s32 16, 16
      %14 = vsyncadd [#allocation5], %s13
      %17 = dma.hbm_to_smem %s0, 16, [#allocation2], [#allocation5]
    $region5: #{tpu_custom_call.1} parent=1 // pred_fallthru
      _
    // Predicated region
    $region6: #{tpu_custom_call.1} parent=1 // pred_check
      _
    $region7: #{tpu_custom_call.1} parent=1 // pred_check_branch
      %19 = sbr.rel (0) target = $region9
    $region8: #{tpu_custom_call.1} parent=1 // pred_region
      %s21 = ssub.s32 64, 64
      %22 = vsyncadd [#allocation3], %s21
      %s24 = sshll.u32 [#allocation6], 4
      %s25 = int_to_ptr.vmem [resolvable:$true] %s24
      %27 = dma.hbm_to_vmem [thread:$0]  %s1, 64, %s25, [#allocation3]
    $region9: #{tpu_custom_call.1} parent=1 // pred_fallthru
      _
    // Predicated region
    $region10: #{tpu_custom_call.1} parent=1 // pred_check
      _
    $region11: #{tpu_custom_call.1} parent=1 // pred_check_branch
      %29 = sbr.rel (0) target = $region13
    $region12: #{tpu_custom_call.1} parent=1 // pred_region
      %30 = dma.done [#allocation5], 16
    $region13: #{tpu_custom_call.1} parent=1 // pred_fallthru
      _
    // Predicated region
    $region14: #{tpu_custom_call.1} parent=1 // pred_check
      _
    $region15: #{tpu_custom_call.1} parent=1 // pred_check_branch
      %32 = sbr.rel (0) target = $region17
    $region16: #{tpu_custom_call.1} parent=1 // pred_region
      %33 = dma.done [#allocation3], 64
    $region17: #{tpu_custom_call.1} parent=1 // pred_fallthru
      _
    %34 = sfence
    %v35 = vld [vmem:[#allocation6] sm:$0xf]
    %s36 = sld [smem:[#allocation2]]
    %s37 = sld [smem:[#allocation2 + $0x1]]
    %s38 = sld [smem:[#allocation2 + $0x2]]
    %s39 = sld [smem:[#allocation2 + $0x3]]
    %s40 = sld [smem:[#allocation2 + $0x4]]
    %v41 = vstv %s40
    %vm42 = vcmp.ge.f32.partialorder %v35, %v41
    %s43 = sld [smem:[#allocation2 + $0x5]]
    %v44 = vstv %s43
    %v45 = vstv %s36
    %v46 = vsel %vm42, %v44, %v45
    %s47 = sld [smem:[#allocation2 + $0x6]]
    %v48 = vstv %s47
    %v49 = vstv %s37
    %v50 = vsel %vm42, %v48, %v49
    %s51 = sld [smem:[#allocation2 + $0x7]]
    %v52 = vstv %s51
    %v53 = vstv %s38
    %v54 = vsel %vm42, %v52, %v53
    %s55 = sld [smem:[#allocation2 + $0x8]]
    %v56 = vstv %s55
    %v57 = vstv %s39
    %v58 = vsel %vm42, %v56, %v57
    %s59 = sld [smem:[#allocation2 + $0x9]]
    %v60 = vstv %s59
    %vm61 = vcmp.ge.f32.partialorder %v35, %v60
    %s62 = sld [smem:[#allocation2 + $0xa]]
    %v63 = vstv %s62
    %v64 = vsel %vm61, %v63, %v46
    %s65 = sld [smem:[#allocation2 + $0xb]]
    %v66 = vstv %s65
    %v67 = vsel %vm61, %v66, %v50
    %s68 = sld [smem:[#allocation2 + $0xc]]
    %v69 = vstv %s68
    %v70 = vsel %vm61, %v69, %v54
    %s71 = sld [smem:[#allocation2 + $0xd]]
    %v72 = vstv %s71
    %v73 = vsel %vm61, %v72, %v58
    %s74 = sld [smem:[#allocation2 + $0xf]]
    %v75 = vstv %s74
    %v76 = vsub.f32 %v35, %v75
    %v77 = vmul.f32 %v73, %v76
    %v78 = vadd.f32 %v77, %v70
    %v79 = vmul.f32 %v78, %v76
    %v80 = vadd.f32 %v79, %v67
    %v81 = vmul.f32 %v80, %v76
    %v82 = vadd.f32 %v81, %v64
    %83 = vst [vmem:[#allocation7] sm:$0xf] %v82
    // Predicated region
    $region18: #{tpu_custom_call.1} parent=1 // pred_check
      _
    $region19: #{tpu_custom_call.1} parent=1 // pred_check_branch
      %85 = sbr.rel (0) target = $region21
    $region20: #{tpu_custom_call.1} parent=1 // pred_region
      %s87 = ssub.s32 64, 64
      %88 = vsyncadd [#allocation4], %s87
      %s90 = sshll.u32 [#allocation7], 4
      %s91 = int_to_ptr.vmem [resolvable:$true] %s90
      %93 = dma.vmem_to_hbm [thread:$0]  %s91, 64, %s2, [#allocation4]
    $region21: #{tpu_custom_call.1} parent=1 // pred_fallthru
      _
    // Predicated region
    $region22: #{tpu_custom_call.1} parent=1 // pred_check
      _
    $region23: #{tpu_custom_call.1} parent=1 // pred_check_branch
      %95 = sbr.rel (0) target = $region25
    $region24: #{tpu_custom_call.1} parent=1 // pred_region
      %96 = dma.done [#allocation4], 64
    $region25: #{tpu_custom_call.1} parent=1 // pred_fallthru
      _
    %97 = vsyncpa [#allocation3], 1
    %98 = vsyncpa [#allocation4], 1
    %99 = vsyncpa [#allocation5], 1

</llo_original>
